<compile_context>
chip_gen: v7x
topology: tpu7x:2x2x1
jax: 0.10.0
libtpu: 0.0.40
codegen_flags: <defaults>
</compile_context>

<pallas_src>
import functools

import jax
import jax.numpy as jnp
import numpy as np
from jax import lax
from jax.experimental import pallas as pl
from jax.experimental.pallas import tpu as pltpu

EPS = 1e-5                             # nn.BatchNorm2d default
VMEM_LIMIT = 48 * 1024 * 1024          # explicit scoped-VMEM budget (v5e/v6e/v7x safe)
FUSED_BUDGET = 24 * 1024 * 1024        # data-path budget for the fused single-pass path
PASS1_BLOCK_BYTES = 8 * 1024 * 1024    # pass-1 x block target (input-only pipeline)
PASS2_BLOCK_BYTES = 4 * 1024 * 1024    # pass-2 x block target (in + out pipelined)


def _round_up(v, m):
    return (v + m - 1) // m * m


def _row_unit(itemsize):
    # Sublane packing: 8 rows per 32-bit sublane tile, 16 for 16-bit, 32 for 8-bit.
    return {4: 8, 2: 16, 1: 32}.get(itemsize, 8)


def _pick_tile(dim, unit, target, min_blocks=1):
    """Largest multiple of `unit` that divides `dim` and is <= target.

    Falls back to the full dim (always a legal block) when `dim` is not a
    multiple of `unit`.  If possible, leaves at least `min_blocks` blocks
    along the axis (v7x megacore: both TensorCores need work)."""
    if dim % unit != 0:
        return dim
    best = unit
    t = unit
    limit = min(dim, max(target, unit))
    while t <= limit:
        if dim % t == 0:
            best = t
        t += unit
    while dim // best < min_blocks and best % (2 * unit) == 0:
        best //= 2
    return best


def _fused_channel_tile(n, c, hwp, itemsize, row_unit, budget_bytes):
    """Channel block Cb for the fused path, or None if nothing fits.

    Per-channel VMEM cost: double-buffered input + output blocks (x dtype)
    plus ~2 full-slab f32 temporaries inside the kernel body."""
    per_c = n * hwp * (4 * itemsize + 2 * 4)
    if per_c <= 0:
        return None
    if c % row_unit != 0:
        return c if c * per_c <= budget_bytes else None
    cb = None
    t = row_unit
    while t <= c:
        if c % t == 0 and t * per_c <= budget_bytes:
            cb = t
        t += row_unit
    if cb is None:
        return None
    # Keep >= 2 channel blocks when we can so both v7x TensorCores get work.
    if c // cb == 1 and cb % (2 * row_unit) == 0:
        cb //= 2
    return cb


# ------------------------- Fused single-pass kernel ------------------------- #
def _fused_kernel(x_ref, gamma_ref, beta_ref, o_ref, *, count):
    """x_ref: (N, Cb, HWp) channel-block slab, fully resident in VMEM.

    Stats, normalization and the conditional affine all run off the same
    buffer, so x is read from HBM exactly once."""
    x = x_ref[...].astype(jnp.float32)                  # (N, Cb, HWp)
    xs = jnp.sum(x, axis=0)                             # (Cb, HWp) batch reduce (VPU)
    xq = jnp.sum(x * x, axis=0)                         # (Cb, HWp)
    s = jnp.sum(xs, axis=1, keepdims=True)              # (Cb, 1) one XLU reduce / step
    q = jnp.sum(xq, axis=1, keepdims=True)              # (Cb, 1)
    inv_count = 1.0 / count
    mean = s * inv_count
    var = jnp.maximum(q * inv_count - mean * mean, 0.0)  # biased var (training BN)
    inv_std = lax.rsqrt(var + EPS)                       # (Cb, 1)
    g = gamma_ref[...].astype(jnp.float32)               # (N, Cb, 1)
    b = beta_ref[...].astype(jnp.float32)                # (N, Cb, 1)
    scale = g * inv_std[None, :, :]
    shift = b - g * (mean * inv_std)[None, :, :]
    o_ref[...] = (x * scale + shift).astype(o_ref.dtype)


# ------------------------------ Pass 1: stats ------------------------------ #
def _stats_kernel(x_ref, sum_ref, sq_ref):
    """x_ref: (rt, ht) tile of the (N*C, HWp) slab.

    sum_ref / sq_ref: (rt, 128) lane-dense partial accumulators, resident
    across the spatial reduction grid axis.  Each step is pure VPU adds over
    static 128-lane-aligned groups; the 128->1 cross-lane reduce happens once
    in the JAX finalize (never in the inner loop)."""

    @pl.when(pl.program_id(1) == 0)
    def _init():
        sum_ref[...] = jnp.zeros_like(sum_ref)
        sq_ref[...] = jnp.zeros_like(sq_ref)

    x = x_ref[...].astype(jnp.float32)
    ht = x_ref.shape[1]
    s = sum_ref[...]
    q = sq_ref[...]
    for g in range(ht // 128):                 # static unroll; lane-aligned slices
        xg = x[:, g * 128:(g + 1) * 128]
        s = s + xg
        q = q + xg * xg
    sum_ref[...] = s
    sq_ref[...] = q


# ---------------------------- Pass 2: normalize ----------------------------- #
def _norm_kernel(x_ref, scale_ref, shift_ref, o_ref):
    """out = scale * x + shift per (n, c) row; scale/shift are (rt, 1)."""
    x = x_ref[...].astype(jnp.float32)
    o_ref[...] = (x * scale_ref[...] + shift_ref[...]).astype(o_ref.dtype)


@functools.partial(jax.jit, static_argnames=("num_features", "allow_fused"))
def shared_conditional_batchnorm2d(x, y, embedding_table, *, num_features,
                                   allow_fused=True):
    """x: (N, C, H, W); y: (N,) int32 class ids; embedding_table: (K, 2C)."""
    n, c, h, w = x.shape
    assert c == num_features
    assert embedding_table.shape[1] == 2 * num_features
    hw = h * w
    nc = n * c
    itemsize = x.dtype.itemsize
    row_unit = _row_unit(itemsize)

    # Lane-dense spatial extent: pad H*W up to a multiple of 128 (padded zeros
    # contribute 0 to the sums and are sliced off the output).
    hwp = _round_up(hw, 128)
    pad = hwp - hw
    count = float(n * hw)

    # Conditional affine params (tiny glue: embedding gather + chunk(2, dim=1)).
    gb = jnp.take(embedding_table, y, axis=0)          # (N, 2C)
    gamma = gb[:, :num_features].astype(jnp.float32)   # (N, C)
    beta = gb[:, num_features:].astype(jnp.float32)    # (N, C)

    # ------------------- Fused single-pass path (1R + 1W) ------------------- #
    cb = (_fused_channel_tile(n, c, hwp, itemsize, row_unit, FUSED_BUDGET)
          if allow_fused else None)
    if cb is not None:
        x3 = x.reshape(n, c, hw)
        if pad:
            x3 = jnp.pad(x3, ((0, 0), (0, 0), (0, pad)))
        gamma3 = gamma[:, :, None]                      # (N, C, 1)
        beta3 = beta[:, :, None]
        out3 = pl.pallas_call(
            functools.partial(_fused_kernel, count=count),
            out_shape=jax.ShapeDtypeStruct((n, c, hwp), x.dtype),
            grid=(c // cb,),
            in_specs=[
                pl.BlockSpec((n, cb, hwp), lambda i: (0, i, 0)),
                pl.BlockSpec((n, cb, 1), lambda i: (0, i, 0)),
                pl.BlockSpec((n, cb, 1), lambda i: (0, i, 0)),
            ],
            out_specs=pl.BlockSpec((n, cb, hwp), lambda i: (0, i, 0)),
            compiler_params=pltpu.CompilerParams(
                dimension_semantics=("parallel",),
                vmem_limit_bytes=VMEM_LIMIT),
            cost_estimate=pl.CostEstimate(
                flops=7 * n * c * hwp,
                transcendentals=c,
                bytes_accessed=2 * n * c * hwp * itemsize + 2 * n * c * 4),
        )(x3, gamma3, beta3)
        if pad:
            out3 = out3[:, :, :hw]
        return out3.reshape(n, c, h, w)

    # ------------------------ Two-pass streaming path ------------------------ #
    # (N, C, H, W) -> (N*C, HWp): rows on sublanes, fused spatial on lanes.
    x2 = x.reshape(nc, hw)
    if pad:
        x2 = jnp.pad(x2, ((0, 0), (0, pad)))

    # Row tile: dtype-aware sublane multiple, >= 2 blocks when possible (v7x).
    rt = _pick_tile(nc, row_unit, 512, min_blocks=2)
    grid_rows = nc // rt

    # Pass-1 lane tile: ~8 MiB blocks (only the input is double-buffered),
    # capped at 128 lane-groups per block to bound the static unroll.
    lane_target1 = min(PASS1_BLOCK_BYTES // (rt * itemsize), 128 * 128)
    ht1 = _pick_tile(hwp, 128, max(128, lane_target1 // 128 * 128))
    # Pass-2 lane tile: ~4 MiB blocks (input + output double-buffered).
    lane_target2 = PASS2_BLOCK_BYTES // (rt * itemsize)
    ht2 = _pick_tile(hwp, 128, max(128, lane_target2 // 128 * 128),
                     min_blocks=2 if grid_rows == 1 else 1)

    # ---- Pass 1: per-(n, c) partial sums / sums-of-squares, one read of x. ----
    sums, sqs = pl.pallas_call(
        _stats_kernel,
        out_shape=(
            jax.ShapeDtypeStruct((nc, 128), jnp.float32),
            jax.ShapeDtypeStruct((nc, 128), jnp.float32),
        ),
        grid=(grid_rows, hwp // ht1),
        in_specs=[pl.BlockSpec((rt, ht1), lambda i, j: (i, j))],
        out_specs=(
            pl.BlockSpec((rt, 128), lambda i, j: (i, 0)),   # resident across j
            pl.BlockSpec((rt, 128), lambda i, j: (i, 0)),   # resident across j
        ),
        compiler_params=pltpu.CompilerParams(
            dimension_semantics=("parallel", "arbitrary"),
            vmem_limit_bytes=VMEM_LIMIT),
        cost_estimate=pl.CostEstimate(
            flops=3 * nc * hwp,
            transcendentals=0,
            bytes_accessed=nc * hwp * itemsize + 2 * nc * 128 * 4),
    )(x2)

    # ---- Finalize (tiny, plain JAX): fold BN stats with gamma/beta. ----
    sum_c = jnp.sum(sums, axis=1).reshape(n, c).sum(axis=0)    # (C,)
    sq_c = jnp.sum(sqs, axis=1).reshape(n, c).sum(axis=0)      # (C,)
    mean = sum_c / count
    var = jnp.maximum(sq_c / count - mean * mean, 0.0)         # biased var (training BN)
    inv_std = lax.rsqrt(var + EPS)
    scale = (gamma * inv_std).reshape(nc, 1)                   # (N*C, 1)
    shift = (beta - gamma * (mean * inv_std)).reshape(nc, 1)

    # ---- Pass 2: out = scale * x + shift over lane-dense pipelined tiles. ----
    out2 = pl.pallas_call(
        _norm_kernel,
        out_shape=jax.ShapeDtypeStruct((nc, hwp), x.dtype),
        grid=(grid_rows, hwp // ht2),
        in_specs=[
            pl.BlockSpec((rt, ht2), lambda i, j: (i, j)),
            pl.BlockSpec((rt, 1), lambda i, j: (i, 0)),        # resident across j
            pl.BlockSpec((rt, 1), lambda i, j: (i, 0)),        # resident across j
        ],
        out_specs=pl.BlockSpec((rt, ht2), lambda i, j: (i, j)),
        compiler_params=pltpu.CompilerParams(
            dimension_semantics=("parallel", "parallel"),
            vmem_limit_bytes=VMEM_LIMIT),
        cost_estimate=pl.CostEstimate(
            flops=2 * nc * hwp,
            transcendentals=0,
            bytes_accessed=2 * nc * hwp * itemsize + 2 * nc * 4),
    )(x2, scale, shift)

    if pad:
        out2 = out2[:, :hw]
    return out2.reshape(n, c, h, w)


def _reference(x, y, embedding_table, num_features):
    """Pure-JAX reference mirroring the PyTorch forward."""
    mean = jnp.mean(x, axis=(0, 2, 3), keepdims=True)
    var = jnp.mean((x - mean) ** 2, axis=(0, 2, 3), keepdims=True)
    xhat = (x - mean) / jnp.sqrt(var + EPS)
    gb = embedding_table[y]
    gamma = gb[:, :num_features].reshape(-1, num_features, 1, 1)
    beta = gb[:, num_features:].reshape(-1, num_features, 1, 1)
    return gamma * xhat + beta


if __name__ == "__main__":
    N, C, H, W = 2, 4, 16, 16
    NUM_CLASSES = 8

    key = jax.random.PRNGKey(0)
    kx, ky, ke = jax.random.split(key, 3)

    x = jax.random.normal(kx, (N, C, H, W), dtype=jnp.float32)
    y = jax.random.randint(ky, (N,), 0, NUM_CLASSES, dtype=jnp.int32)
    # Deterministic synthetic embedding weights (nn.Embedding-style N(0,1) init).
    embedding_table = jax.random.normal(ke, (NUM_CLASSES, 2 * C), dtype=jnp.float32)

    ref = _reference(x, y, embedding_table, C)

    # Fused single-pass path (small channel-block slab fits VMEM).
    out_fused = jax.block_until_ready(
        shared_conditional_batchnorm2d(x, y, embedding_table, num_features=C))
    np.testing.assert_allclose(np.asarray(out_fused), np.asarray(ref),
                               rtol=1e-4, atol=1e-5)

    # Two-pass streaming path (forced) — the fallback used for large slabs.
    out_two_pass = jax.block_until_ready(
        shared_conditional_batchnorm2d(x, y, embedding_table, num_features=C,
                                       allow_fused=False))
    np.testing.assert_allclose(np.asarray(out_two_pass), np.asarray(ref),
                               rtol=1e-4, atol=1e-5)

    print("KERNEL_OK")
</pallas_src>

<mosaic_0001>
module attributes {stable_mosaic.version = 11 : i64} {
  func.func @_fused_kernel(%arg0: i32, %arg1: memref<2x4x256xf32, #tpu.memory_space<vmem>>, %arg2: memref<2x4x1xf32, #tpu.memory_space<vmem>>, %arg3: memref<2x4x1xf32, #tpu.memory_space<vmem>>, %arg4: memref<2x4x256xf32, #tpu.memory_space<vmem>>) attributes {dimension_semantics = [#tpu.dimension_semantics<parallel>], iteration_bounds = array<i64: 1>, scalar_prefetch = 0 : i64, scratch_operands = 0 : i64, tpu.core_type = #tpu.core_type<tc>, window_params = [{transform_indices = @transform_0, window_bounds = array<i64: 2, 4, 256>}, {transform_indices = @transform_1, window_bounds = array<i64: 2, 4, 1>}, {transform_indices = @transform_2, window_bounds = array<i64: 2, 4, 1>}, {transform_indices = @transform_3, window_bounds = array<i64: 2, 4, 256>}]} {
    %c0 = arith.constant 0 : index
    %c0_0 = arith.constant 0 : index
    %c0_1 = arith.constant 0 : index
    %0 = vector.load %arg1[%c0, %c0_0, %c0_1] : memref<2x4x256xf32, #tpu.memory_space<vmem>>, vector<2x4x256xf32>
    %cst = arith.constant dense<0.000000e+00> : vector<4x256xf32>
    %1 = vector.multi_reduction <add>, %0, %cst [0] : vector<2x4x256xf32> to vector<4x256xf32>
    %2 = arith.mulf %0, %0 : vector<2x4x256xf32>
    %cst_2 = arith.constant dense<0.000000e+00> : vector<4x256xf32>
    %3 = vector.multi_reduction <add>, %2, %cst_2 [0] : vector<2x4x256xf32> to vector<4x256xf32>
    %cst_3 = arith.constant dense<0.000000e+00> : vector<4xf32>
    %4 = vector.multi_reduction <add>, %1, %cst_3 [1] : vector<4x256xf32> to vector<4xf32>
    %5 = vector.shape_cast %4 : vector<4xf32> to vector<4x1xf32>
    %cst_4 = arith.constant dense<0.000000e+00> : vector<4xf32>
    %6 = vector.multi_reduction <add>, %3, %cst_4 [1] : vector<4x256xf32> to vector<4xf32>
    %7 = vector.shape_cast %6 : vector<4xf32> to vector<4x1xf32>
    %cst_5 = arith.constant 0.001953125 : f32
    %8 = vector.broadcast %cst_5 : f32 to vector<4x1xf32>
    %9 = arith.mulf %5, %8 : vector<4x1xf32>
    %cst_6 = arith.constant 0.001953125 : f32
    %10 = vector.broadcast %cst_6 : f32 to vector<4x1xf32>
    %11 = arith.mulf %7, %10 : vector<4x1xf32>
    %12 = arith.mulf %9, %9 : vector<4x1xf32>
    %13 = arith.subf %11, %12 : vector<4x1xf32>
    %cst_7 = arith.constant 0.000000e+00 : f32
    %14 = vector.broadcast %cst_7 : f32 to vector<4x1xf32>
    %15 = arith.maximumf %13, %14 : vector<4x1xf32>
    %cst_8 = arith.constant 9.99999974E-6 : f32
    %16 = vector.broadcast %cst_8 : f32 to vector<4x1xf32>
    %17 = arith.addf %15, %16 : vector<4x1xf32>
    %18 = math.rsqrt %17 : vector<4x1xf32>
    %c0_9 = arith.constant 0 : index
    %c0_10 = arith.constant 0 : index
    %c0_11 = arith.constant 0 : index
    %19 = vector.load %arg2[%c0_9, %c0_10, %c0_11] : memref<2x4x1xf32, #tpu.memory_space<vmem>>, vector<2x4x1xf32>
    %c0_12 = arith.constant 0 : index
    %c0_13 = arith.constant 0 : index
    %c0_14 = arith.constant 0 : index
    %20 = vector.load %arg3[%c0_12, %c0_13, %c0_14] : memref<2x4x1xf32, #tpu.memory_space<vmem>>, vector<2x4x1xf32>
    %21 = vector.shape_cast %18 : vector<4x1xf32> to vector<1x4x1xf32>
    %22 = vector.broadcast %21 : vector<1x4x1xf32> to vector<2x4x1xf32>
    %23 = arith.mulf %19, %22 : vector<2x4x1xf32>
    %24 = arith.mulf %9, %18 : vector<4x1xf32>
    %25 = vector.shape_cast %24 : vector<4x1xf32> to vector<1x4x1xf32>
    %26 = vector.broadcast %25 : vector<1x4x1xf32> to vector<2x4x1xf32>
    %27 = arith.mulf %19, %26 : vector<2x4x1xf32>
    %28 = arith.subf %20, %27 : vector<2x4x1xf32>
    %29 = vector.broadcast %23 : vector<2x4x1xf32> to vector<2x4x256xf32>
    %30 = arith.mulf %0, %29 : vector<2x4x256xf32>
    %31 = vector.broadcast %28 : vector<2x4x1xf32> to vector<2x4x256xf32>
    %32 = arith.addf %30, %31 : vector<2x4x256xf32>
    %c0_15 = arith.constant 0 : index
    %c0_16 = arith.constant 0 : index
    %c0_17 = arith.constant 0 : index
    %33 = vector.load %arg4[%c0_15, %c0_16, %c0_17] : memref<2x4x256xf32, #tpu.memory_space<vmem>>, vector<2x4x256xf32>
    tpu.vector_store %arg4[%c0_15, %c0_16, %c0_17], %32 {strides = array<i32>} : memref<2x4x256xf32, #tpu.memory_space<vmem>>, vector<2x4x256xf32>,
    return
  }
  func.func @transform_0(%arg0: i32) -> (i32, i32, i32) {
    %c0_i32 = arith.constant 0 : i32
    %c0_i32_0 = arith.constant 0 : i32
    %c0_i32_1 = arith.constant 0 : i32
    return %c0_i32, %arg0, %c0_i32_0 : i32, i32, i32
  }
  func.func @transform_1(%arg0: i32) -> (i32, i32, i32) {
    %c0_i32 = arith.constant 0 : i32
    %c0_i32_0 = arith.constant 0 : i32
    %c0_i32_1 = arith.constant 0 : i32
    return %c0_i32, %arg0, %c0_i32_0 : i32, i32, i32
  }
  func.func @transform_2(%arg0: i32) -> (i32, i32, i32) {
    %c0_i32 = arith.constant 0 : i32
    %c0_i32_0 = arith.constant 0 : i32
    %c0_i32_1 = arith.constant 0 : i32
    return %c0_i32, %arg0, %c0_i32_0 : i32, i32, i32
  }
  func.func @transform_3(%arg0: i32) -> (i32, i32, i32) {
    %c0_i32 = arith.constant 0 : i32
    %c0_i32_0 = arith.constant 0 : i32
    %c0_i32_1 = arith.constant 0 : i32
    return %c0_i32, %arg0, %c0_i32_0 : i32, i32, i32
  }
}

</mosaic_0001>

<llo_original>
// kernel: shared_conditional_batchnorm2d.1
$region0: #{shared_conditional_batchnorm2d.1}
  #allocation0 [shape = 'u32[]', space=smem, size = 0x4, offset = 0x4, fixed_abs, tag = 'smem constant byte address 0x4 - core index']
  #allocation1 [shape = 'u32[144,128]{1,0:T(1,128)}', space=vmem, size = 0x12000, scoped, tag = 'internal scratch']
  %s0 = inlined_call_operand.vmem [shape: f32[2,4,256], index: 0, kind: input, shape index: {}]
  %s1 = inlined_call_operand.vmem [shape: f32[2,4,1], index: 1, kind: input, shape index: {}]
  %s2 = inlined_call_operand.vmem [shape: f32[2,4,1], index: 2, kind: input, shape index: {}]
  %s3 = inlined_call_operand.vmem [shape: f32[2,4,256], index: 3, kind: output, shape index: {}]
  %s4 = sld [smem:[#allocation0]]
  $region22: #{shared_conditional_batchnorm2d.1} parent=0
    _
  %s6 = ssub.s32 1, %s4
  %s7 = scalar_select 0, %s6, %s4
  // Predicated region
  $region2: #{shared_conditional_batchnorm2d.1} parent=0 // pred_check
    _
  $region3: #{shared_conditional_batchnorm2d.1} parent=0 // pred_check_branch
    %9 = sbr.rel (0) target = $region5
  $region4: #{shared_conditional_batchnorm2d.1} parent=0 // pred_region
    _
  $region5: #{shared_conditional_batchnorm2d.1} parent=0 // pred_fallthru
    _
  // Predicated region
  $region6: #{shared_conditional_batchnorm2d.1} parent=0 // pred_check
    _
  $region7: #{shared_conditional_batchnorm2d.1} parent=0 // pred_check_branch
    %11 = sbr.rel (0) target = $region9
  $region8: #{shared_conditional_batchnorm2d.1} parent=0 // pred_region
    _
  $region9: #{shared_conditional_batchnorm2d.1} parent=0 // pred_fallthru
    _
  // Predicated region
  $region10: #{shared_conditional_batchnorm2d.1} parent=0 // pred_check
    _
  $region11: #{shared_conditional_batchnorm2d.1} parent=0 // pred_check_branch
    %13 = sbr.rel (0) target = $region13
  $region12: #{shared_conditional_batchnorm2d.1} parent=0 // pred_region
    _
  $region13: #{shared_conditional_batchnorm2d.1} parent=0 // pred_fallthru
    _
  %v14 = vld [vmem:[%s0] sm:$0xff]
  %v15 = vld [vmem:[%s0 + $0x8] sm:$0xff]
  %v18 = vcombine.high %v14, %v14
  %v19 = vcombine.high %v15, %v15
  %vm22 = vcmask 1043456
  %v23 = vsel %vm22, %v14, 0.0
  %v24 = vsel %vm22, %v15, 0.0
  %v25 = vadd.f32 %v23, %v24
  %v26 = vsel %vm22, %v18, 0.0
  %v27 = vsel %vm22, %v19, 0.0
  %v28 = vadd.f32 %v26, %v27
  %v29 = vmul.f32 %v14, %v14
  %v30 = vmul.f32 %v15, %v15
  %v33 = vcombine.high %v29, %v29
  %v34 = vcombine.high %v30, %v30
  %v37 = vsel %vm22, %v29, 0.0
  %v38 = vsel %vm22, %v30, 0.0
  %v39 = vadd.f32 %v37, %v38
  %v40 = vsel %vm22, %v33, 0.0
  %v41 = vsel %vm22, %v34, 0.0
  %v42 = vadd.f32 %v40, %v41
  %v43 = vsel %vm22, %v25, 0.0
  %v44 = vsel %vm22, %v28, 0.0
  %v45 = vadd.f32 %v43, %v44
  %46 = vadd.xlane.f32.xlu0 %v45
  %v47 = vpop.xlane.xlu0 %46
  %v48 = vsel %vm22, %v39, 0.0
  %v49 = vsel %vm22, %v42, 0.0
  %v50 = vadd.f32 %v48, %v49
  %51 = vadd.xlane.f32.xlu0 %v50
  %v52 = vpop.xlane.xlu0 %51
  %v53 = vmul.f32 %v47, 0.001953125
  %v54 = vmul.f32 %v52, 0.001953125
  %v55 = vmul.f32 %v53, %v53
  %v56 = vsub.f32 %v54, %v55
  %v57 = vmax.f32 %v56, 0.0
  %v58 = vadd.f32 %v57, 1e-05
  %v59 = vrsqrt.pop %v58
  %v60 = vld [vmem:[%s1] sm:$0xf]
  %v61 = vld [vmem:[%s1 + $0x4] sm:$0xf]
  %v62 = vld [vmem:[%s2] sm:$0xf]
  %v63 = vld [vmem:[%s2 + $0x4] sm:$0xf]
  %v64 = vmul.f32 %v60, %v59
  %v65 = vmul.f32 %v61, %v59
  %v66 = vmul.f32 %v53, %v59
  %v67 = vmul.f32 %v60, %v66
  %v68 = vmul.f32 %v61, %v66
  %v69 = vsub.f32 %v62, %v67
  %v70 = vsub.f32 %v63, %v68
  %72 = vset.pattern.permute.xlu0 0
  %73 = vperm.xlu0 %72, %v64
  %v74 = vpop.permute.xlu0 %73
  %76 = vset.pattern.permute.xlu0 0
  %77 = vperm.xlu0 %76, %v65
  %v78 = vpop.permute.xlu0 %77
  %v80 = vunpack.c.l.s4 839922192
  %v81 = vunpack.c.0.s8 %v80
  %v82 = vlaneseq
  %v83 = vshrl.u32 %v82, 7
  %v84 = vsub.s32 %v81, %v83
  %v85 = vrot.slane %v74, %v84
  %v87 = vunpack.c.l.s4 839922192
  %v88 = vunpack.c.0.s8 %v87
  %v89 = vlaneseq
  %v90 = vshrl.u32 %v89, 7
  %v91 = vsub.s32 %v88, %v90
  %v92 = vrot.slane %v78, %v91
  %v95 = vmul.f32 %v14, %v85
  %v96 = vmul.f32 %v15, %v92
  %98 = vset.pattern.permute.xlu0 0
  %99 = vperm.xlu0 %98, %v69
  %v100 = vpop.permute.xlu0 %99
  %102 = vset.pattern.permute.xlu0 0
  %103 = vperm.xlu0 %102, %v70
  %v104 = vpop.permute.xlu0 %103
  %v106 = vunpack.c.l.s4 839922192
  %v107 = vunpack.c.0.s8 %v106
  %v108 = vlaneseq
  %v109 = vshrl.u32 %v108, 7
  %v110 = vsub.s32 %v107, %v109
  %v111 = vrot.slane %v100, %v110
  %v113 = vunpack.c.l.s4 839922192
  %v114 = vunpack.c.0.s8 %v113
  %v115 = vlaneseq
  %v116 = vshrl.u32 %v115, 7
  %v117 = vsub.s32 %v114, %v116
  %v118 = vrot.slane %v104, %v117
  %v121 = vadd.f32 %v95, %v111
  %v122 = vadd.f32 %v96, %v118
  %123 = vst [vmem:[%s3] sm:$0xff] %v121
  %124 = vst [vmem:[%s3 + $0x8] sm:$0xff] %v122
  // Predicated region
  $region14: #{shared_conditional_batchnorm2d.1} parent=0 // pred_check
    _
  $region15: #{shared_conditional_batchnorm2d.1} parent=0 // pred_check_branch
    %126 = sbr.rel (0) target = $region17
  $region16: #{shared_conditional_batchnorm2d.1} parent=0 // pred_region
    _
  $region17: #{shared_conditional_batchnorm2d.1} parent=0 // pred_fallthru
    _
  // Predicated region
  $region18: #{shared_conditional_batchnorm2d.1} parent=0 // pred_check
    _
  $region19: #{shared_conditional_batchnorm2d.1} parent=0 // pred_check_branch
    %128 = sbr.rel (0) target = $region21
  $region20: #{shared_conditional_batchnorm2d.1} parent=0 // pred_region
    _
  $region21: #{shared_conditional_batchnorm2d.1} parent=0 // pred_fallthru
    _

</llo_original>
